<compile_context>
chip_gen: v5e
topology: v5e:2x2
jax: 0.10.0
libtpu: 0.0.40
codegen_flags: <defaults>
</compile_context>

<pallas_src>
import jax
import jax.numpy as jnp
from jax.experimental import pallas as pl
from jax.experimental.pallas import tpu as pltpu

# ----------------------------- model sizes (small, consistent w/ module) ----
OUTPUT_DIM = 10     # vocab size
HIDDEN_DIM = 32     # H  (torch code asserts 512; relaxed for the small test)
EMBED_DIM = 16      # E
NUM_LAYERS = 1      # forward() only supports 1 layer (hidden shape (1,1,H))
SEQ_LEN = 8         # S
BATCH = 2           # independent decoder instances mapped over the grid

PRED_LANES = 128    # lane-dense prediction width (>= OUTPUT_DIM)
assert OUTPUT_DIM <= PRED_LANES


def _round_up(x, m):
    return (x + m - 1) // m * m


# Packed weight slab layout: every section starts on an 8-row boundary and is
# 128 lanes wide (4H == 128 for H == 32), so in-kernel static slices stay
# (8,128)-tile aligned.
N_EMB = _round_up(OUTPUT_DIM, 8)          # embedding rows pre-projected by W_ih
R_EMB = 0                                  # (N_EMB, 4H)  emb_table @ W_ih_emb^T
R_WIHC = R_EMB + N_EMB                     # (2H, 4H) W_ih^T, context columns
R_WHH = R_WIHC + 2 * HIDDEN_DIM            # (H, 4H)  W_hh^T
R_BG = R_WHH + HIDDEN_DIM                  # (1, 4H)  b_ih + b_hh   (8-row pad)
R_WFC = R_BG + 8                           # (H, 128) fc_w^T        (lane pad)
R_BFC = R_WFC + HIDDEN_DIM                 # (1, 128) fc bias       (8-row pad)
N_PACK = R_BFC + 8                         # total rows = 160


# ----------------------------- Pallas kernel --------------------------------
def decoder_kernel(tok_ref, enc_ref, h0_ref, c0_ref, w_ref, pred_ref, cell_ref):
    # tok_ref : (1, S, 1) int32 VMEM      - decoder input token ids (this instance)
    # enc_ref : (1, S, 2H) VMEM           - encoder_output
    # h0_ref  : (1, 1, H) VMEM            - initial hidden
    # c0_ref  : (1, 1, H) VMEM            - initial cell
    # w_ref   : (N_PACK, 128) VMEM        - packed weights (one DMA, shared)
    # pred_ref: (1, S, 128) VMEM out      - lane-padded predictions
    # cell_ref: (1, 1, H) VMEM out        - new cell state
    H = HIDDEN_DIM
    S = enc_ref.shape[1]

    tok = tok_ref[0]                                     # (S, 1) int32
    enc = enc_ref[0]                                     # (S, 2H)
    h = h0_ref[0]                                        # (1, H)
    c = c0_ref[0]                                        # (1, H)

    w_emb = w_ref[pl.ds(R_EMB, N_EMB), :]                # (N_EMB, 4H)
    wihc = w_ref[pl.ds(R_WIHC, 2 * H), :]                # (2H, 4H)
    whh = w_ref[pl.ds(R_WHH, H), :]                      # (H, 4H)
    bg = w_ref[pl.ds(R_BG, 1), :]                        # (1, 4H)
    wfc = w_ref[pl.ds(R_WFC, H), :]                      # (H, 128)
    bfc = w_ref[pl.ds(R_BFC, 1), :]                      # (1, 128)

    # Attention: softmax over a singleton dim -> weights == 1.0, so
    # context_vector == encoder_output.  Embedding gather is hoisted out of
    # the recurrence: one-hot(tok) @ pre-projected embedding rows, added into
    # the context input projection once (two small MXU pushes, off the serial
    # chain; no per-step dynamic loads, no OOB risk for bad token ids).
    emb_iota = jax.lax.broadcasted_iota(jnp.int32, (S, N_EMB), 1)
    onehot = (emb_iota == tok).astype(jnp.float32)       # (S, N_EMB)
    gx = (jnp.dot(onehot, w_emb, preferred_element_type=jnp.float32)
          + jnp.dot(enc, wihc, preferred_element_type=jnp.float32)
          + bg)                                          # (S, 4H)

    # One-EUP gate nonlinearity: the i/f/o columns of every gate weight/bias
    # were pre-scaled by 0.5 in prepare_params, so a single tanh per step
    # yields sigmoid via 0.5*tanh(x/2)+0.5; the g-gate column keeps scale 1.
    lane = jax.lax.broadcasted_iota(jnp.int32, (1, 4 * H), 1)
    is_tanh_lane = (lane >= 2 * H) & (lane < 3 * H)
    gate_mul = jnp.where(is_tanh_lane, 1.0, 0.5).astype(jnp.float32)
    gate_add = jnp.where(is_tanh_lane, 0.0, 0.5).astype(jnp.float32)

    # Fully unrolled 1-layer LSTM recurrence; everything stays in vregs.
    # TODO(synk): resident-RHS MXU driving (matmul_push_rhs / matmul_acc_lhs)
    # would avoid re-feeding whh through the systolic array every step.
    hs = []
    for t in range(S):
        g = gx[t:t + 1, :] + jnp.dot(
            h, whh, preferred_element_type=jnp.float32)  # (1, 4H)
        act = jnp.tanh(g) * gate_mul + gate_add          # one EUP push + VPU fixup
        i = act[:, 0 * H:1 * H]
        f = act[:, 1 * H:2 * H]
        gg = act[:, 2 * H:3 * H]
        o = act[:, 3 * H:4 * H]
        c = f * c + i * gg
        h = o * jnp.tanh(c)
        hs.append(h)

    outs = jnp.concatenate(hs, axis=0)                   # (S, H)

    # fc on all timesteps, lane-dense (columns >= OUTPUT_DIM are zero).
    pred_ref[0] = jnp.dot(outs, wfc, preferred_element_type=jnp.float32) + bfc
    cell_ref[0] = c


# ----------------------------- parameter pre-baking (outside hot path) ------
def prepare_params(params):
    """Pack all weights into one lane-dense f32 slab; call once, not per call.

    The i/f/o (sigmoid) gate columns of the input/recurrent weights and the
    gate bias are pre-scaled by 0.5 so the kernel needs only one tanh per
    step (sigmoid(x) == 0.5*tanh(x/2) + 0.5).  Kept in f32 on purpose: a bf16
    slab would save ~40 KiB of DMA but risks the 1e-3 accuracy target.
    """
    H, E, O = HIDDEN_DIM, EMBED_DIM, OUTPUT_DIM
    Wih = params["lstm_w_ih"]                            # (4H, 2H+E)
    wihc_t = jnp.transpose(Wih[:, :2 * H])               # (2H, 4H)
    wihe_t = jnp.transpose(Wih[:, 2 * H:])               # (E, 4H)
    emb_gate = params["emb_table"] @ wihe_t              # (O, 4H) pre-projected
    whh_t = jnp.transpose(params["lstm_w_hh"])           # (H, 4H)
    bg = (params["lstm_b_ih"] + params["lstm_b_hh"]).reshape(1, 4 * H)

    # Pre-scale sigmoid (i/f/o) gate columns by 0.5 for the one-tanh trick.
    col = jnp.arange(4 * H)
    sig_scale = jnp.where((col >= 2 * H) & (col < 3 * H), 1.0, 0.5).reshape(1, 4 * H)
    emb_gate = emb_gate * sig_scale
    wihc_t = wihc_t * sig_scale
    whh_t = whh_t * sig_scale
    bg = bg * sig_scale

    wfc_t = jnp.transpose(params["fc_w"])                # (H, O)
    bfc = params["fc_b"].reshape(1, O)

    def pad_rows(a, rows):
        return jnp.pad(a, ((0, rows - a.shape[0]), (0, 0)))

    def pad_cols(a, cols):
        return jnp.pad(a, ((0, 0), (0, cols - a.shape[1])))

    wpack = jnp.concatenate(
        [
            pad_rows(emb_gate, N_EMB),                   # rows [R_EMB,  R_WIHC)
            wihc_t,                                      # rows [R_WIHC, R_WHH)
            whh_t,                                       # rows [R_WHH,  R_BG)
            pad_rows(bg, 8),                             # rows [R_BG,   R_WFC)
            pad_cols(wfc_t, PRED_LANES),                 # rows [R_WFC,  R_BFC)
            pad_rows(pad_cols(bfc, PRED_LANES), 8),      # rows [R_BFC,  N_PACK)
        ],
        axis=0,
    ).astype(jnp.float32)
    assert wpack.shape == (N_PACK, PRED_LANES)
    return wpack


# ----------------------------- wrapper ---------------------------------------
@jax.jit
def decoder_forward(x_tokens, encoder_output, hidden, cell, wpack):
    """Runs B independent decoder instances in one pallas_call.

    x_tokens: (B, S) int32; encoder_output: (B, S, 2H); hidden/cell: (B, 1, H)
    (the module's (num_layers=1, batch=1, H) state per instance).
    Returns (predictions (B, S, O), (ORIGINAL hidden, NEW cell)).
    """
    B, S = x_tokens.shape
    H, O = HIDDEN_DIM, OUTPUT_DIM
    tok = x_tokens.reshape(B, S, 1).astype(jnp.int32)

    pred_pad, new_cell = pl.pallas_call(
        decoder_kernel,
        out_shape=(
            jax.ShapeDtypeStruct((B, S, PRED_LANES), jnp.float32),
            jax.ShapeDtypeStruct((B, 1, H), jnp.float32),
        ),
        grid=(B,),
        in_specs=[
            pl.BlockSpec((1, S, 1), lambda b: (b, 0, 0)),           # tokens
            pl.BlockSpec((1, S, 2 * H), lambda b: (b, 0, 0)),       # encoder out
            pl.BlockSpec((1, 1, H), lambda b: (b, 0, 0)),           # hidden
            pl.BlockSpec((1, 1, H), lambda b: (b, 0, 0)),           # cell
            pl.BlockSpec((N_PACK, PRED_LANES), lambda b: (0, 0)),   # weights (shared)
        ],
        out_specs=(
            pl.BlockSpec((1, S, PRED_LANES), lambda b: (b, 0, 0)),
            pl.BlockSpec((1, 1, H), lambda b: (b, 0, 0)),
        ),
        compiler_params=pltpu.CompilerParams(
            dimension_semantics=("parallel",)),  # shard instances across TCs (v7x)
    )(tok, encoder_output, hidden, cell, wpack)

    # torch returns (predictions, (ORIGINAL hidden, NEW cell))
    return pred_pad[:, :, :O], (hidden, new_cell)


# ----------------------------- pure-JAX reference (single instance) ----------
def decoder_reference(x_tokens, encoder_output, hidden, cell, params):
    H, O = HIDDEN_DIM, OUTPUT_DIM
    S = encoder_output.shape[1]
    emb = jnp.take(params["emb_table"], x_tokens, axis=0)
    enc = encoder_output[0]
    h_rep = jnp.broadcast_to(hidden[0], (S, H))
    energy_in = jnp.concatenate([h_rep, enc], axis=1)
    energy = jnp.maximum(energy_in @ params["energy_w"].T + params["energy_b"], 0.0)
    attention = jnp.ones_like(energy)               # softmax over singleton dim 0
    ctx = attention * enc
    rnn_in = jnp.concatenate([ctx, emb], axis=1)
    h, c = hidden[0], cell[0]
    outs = []
    for t in range(S):
        g = (rnn_in[t:t + 1] @ params["lstm_w_ih"].T + params["lstm_b_ih"]
             + h @ params["lstm_w_hh"].T + params["lstm_b_hh"])
        i = jax.nn.sigmoid(g[:, :H])
        f = jax.nn.sigmoid(g[:, H:2 * H])
        gg = jnp.tanh(g[:, 2 * H:3 * H])
        o = jax.nn.sigmoid(g[:, 3 * H:])
        c = f * c + i * gg
        h = o * jnp.tanh(c)
        outs.append(h)
    outs = jnp.concatenate(outs, axis=0)
    pred = outs @ params["fc_w"].T + params["fc_b"]
    return pred, c


# ----------------------------- main -------------------------------------------
if __name__ == "__main__":
    H, E, O, S, B = HIDDEN_DIM, EMBED_DIM, OUTPUT_DIM, SEQ_LEN, BATCH
    key = jax.random.PRNGKey(0)
    keys = jax.random.split(key, 12)

    params = {
        "emb_table": 0.1 * jax.random.normal(keys[0], (O, E), jnp.float32),
        "energy_w": 0.1 * jax.random.normal(keys[1], (1, 3 * H), jnp.float32),
        "energy_b": 0.1 * jax.random.normal(keys[2], (1,), jnp.float32),
        "lstm_w_ih": 0.1 * jax.random.normal(keys[3], (4 * H, 2 * H + E), jnp.float32),
        "lstm_w_hh": 0.1 * jax.random.normal(keys[4], (4 * H, H), jnp.float32),
        "lstm_b_ih": 0.1 * jax.random.normal(keys[5], (4 * H,), jnp.float32),
        "lstm_b_hh": 0.1 * jax.random.normal(keys[6], (4 * H,), jnp.float32),
        "fc_w": 0.1 * jax.random.normal(keys[7], (O, H), jnp.float32),
        "fc_b": 0.1 * jax.random.normal(keys[8], (O,), jnp.float32),
    }

    x_tokens = jax.random.randint(keys[9], (B, S), 0, O, dtype=jnp.int32)
    encoder_output = jax.random.normal(keys[10], (B, S, 2 * H), jnp.float32)
    hc = jax.random.normal(keys[11], (2, B, 1, H), jnp.float32)
    hidden, cell = hc[0], hc[1]

    # one-time weight layout preparation (not part of the per-call hot path)
    wpack = jax.block_until_ready(prepare_params(params))

    pred, (h_out, c_out) = decoder_forward(x_tokens, encoder_output, hidden, cell, wpack)
    jax.block_until_ready((pred, h_out, c_out))

    # correctness check against a pure-JAX reference, per instance
    assert pred.shape == (B, S, O) and h_out.shape == (B, 1, H) and c_out.shape == (B, 1, H)
    for b in range(B):
        pred_ref, c_ref = decoder_reference(
            x_tokens[b], encoder_output[b:b + 1],
            hidden[b:b + 1], cell[b:b + 1], params)
        assert jnp.allclose(pred[b], pred_ref, atol=1e-3, rtol=1e-3)
        assert jnp.allclose(c_out[b], c_ref, atol=1e-3, rtol=1e-3)
    assert jnp.array_equal(h_out, hidden)  # module returns the ORIGINAL hidden

    print("KERNEL_OK")
</pallas_src>

<mosaic_0001>
module attributes {stable_mosaic.version = 11 : i64} {
  func.func @decoder_kernel(%arg0: i32, %arg1: memref<1x8x1xi32, #tpu.memory_space<vmem>>, %arg2: memref<1x8x64xf32, #tpu.memory_space<vmem>>, %arg3: memref<1x1x32xf32, #tpu.memory_space<vmem>>, %arg4: memref<1x1x32xf32, #tpu.memory_space<vmem>>, %arg5: memref<160x128xf32, #tpu.memory_space<vmem>>, %arg6: memref<1x8x128xf32, #tpu.memory_space<vmem>>, %arg7: memref<1x1x32xf32, #tpu.memory_space<vmem>>) attributes {dimension_semantics = [#tpu.dimension_semantics<parallel>], iteration_bounds = array<i64: 2>, scalar_prefetch = 0 : i64, scratch_operands = 0 : i64, tpu.core_type = #tpu.core_type<tc>, window_params = [{transform_indices = @transform_0, window_bounds = array<i64: 1, 8, 1>}, {transform_indices = @transform_1, window_bounds = array<i64: 1, 8, 64>}, {transform_indices = @transform_2, window_bounds = array<i64: 1, 1, 32>}, {transform_indices = @transform_3, window_bounds = array<i64: 1, 1, 32>}, {pipeline_mode = #tpu.pipeline_mode<synchronous>, transform_indices = @transform_4, window_bounds = array<i64: 160, 128>}, {transform_indices = @transform_5, window_bounds = array<i64: 1, 8, 128>}, {transform_indices = @transform_6, window_bounds = array<i64: 1, 1, 32>}]} {
    %c0 = arith.constant 0 : index
    %c0_0 = arith.constant 0 : index
    %c0_1 = arith.constant 0 : index
    %0 = vector.load %arg1[%c0, %c0_0, %c0_1] : memref<1x8x1xi32, #tpu.memory_space<vmem>>, vector<1x8x1xi32>
    %1 = vector.shape_cast %0 : vector<1x8x1xi32> to vector<8x1xi32>
    %c0_2 = arith.constant 0 : index
    %c0_3 = arith.constant 0 : index
    %c0_4 = arith.constant 0 : index
    %2 = vector.load %arg2[%c0_2, %c0_3, %c0_4] : memref<1x8x64xf32, #tpu.memory_space<vmem>>, vector<1x8x64xf32>
    %3 = vector.shape_cast %2 : vector<1x8x64xf32> to vector<8x64xf32>
    %c0_5 = arith.constant 0 : index
    %c0_6 = arith.constant 0 : index
    %c0_7 = arith.constant 0 : index
    %4 = vector.load %arg3[%c0_5, %c0_6, %c0_7] : memref<1x1x32xf32, #tpu.memory_space<vmem>>, vector<1x1x32xf32>
    %5 = vector.shape_cast %4 : vector<1x1x32xf32> to vector<1x32xf32>
    %c0_8 = arith.constant 0 : index
    %c0_9 = arith.constant 0 : index
    %c0_10 = arith.constant 0 : index
    %6 = vector.load %arg4[%c0_8, %c0_9, %c0_10] : memref<1x1x32xf32, #tpu.memory_space<vmem>>, vector<1x1x32xf32>
    %7 = vector.shape_cast %6 : vector<1x1x32xf32> to vector<1x32xf32>
    %c0_11 = arith.constant 0 : index
    %c0_12 = arith.constant 0 : index
    %8 = vector.load %arg5[%c0_11, %c0_12] : memref<160x128xf32, #tpu.memory_space<vmem>>, vector<16x128xf32>
    %c16 = arith.constant 16 : index
    %c0_13 = arith.constant 0 : index
    %9 = vector.load %arg5[%c16, %c0_13] : memref<160x128xf32, #tpu.memory_space<vmem>>, vector<64x128xf32>
    %c80 = arith.constant 80 : index
    %c0_14 = arith.constant 0 : index
    %10 = vector.load %arg5[%c80, %c0_14] : memref<160x128xf32, #tpu.memory_space<vmem>>, vector<32x128xf32>
    %c112 = arith.constant 112 : index
    %c0_15 = arith.constant 0 : index
    %11 = vector.load %arg5[%c112, %c0_15] : memref<160x128xf32, #tpu.memory_space<vmem>>, vector<1x128xf32>
    %c120 = arith.constant 120 : index
    %c0_16 = arith.constant 0 : index
    %12 = vector.load %arg5[%c120, %c0_16] : memref<160x128xf32, #tpu.memory_space<vmem>>, vector<32x128xf32>
    %c152 = arith.constant 152 : index
    %c0_17 = arith.constant 0 : index
    %13 = vector.load %arg5[%c152, %c0_17] : memref<160x128xf32, #tpu.memory_space<vmem>>, vector<1x128xf32>
    %14 = tpu.iota {dimensions = array<i32: 1>} : vector<8x16xi32>
    %15 = vector.broadcast %1 : vector<8x1xi32> to vector<8x16xi32>
    %16 = arith.cmpi eq, %14, %15 : vector<8x16xi32>
    %17 = arith.extui %16 : vector<8x16xi1> to vector<8x16xi32>
    %18 = arith.sitofp %17 : vector<8x16xi32> to vector<8x16xf32>
    %cst = arith.constant dense<0.000000e+00> : vector<8x128xf32>
    %19 = tpu.matmul %18, %8, %cst {dimension_numbers = #tpu.dot_dimension_numbers<[1], [0], [0], [1], [0, 0, 1, 1], [], []>} : vector<8x16xf32>, vector<16x128xf32>, vector<8x128xf32> -> vector<8x128xf32>
    %cst_18 = arith.constant dense<0.000000e+00> : vector<8x128xf32>
    %20 = tpu.matmul %3, %9, %cst_18 {dimension_numbers = #tpu.dot_dimension_numbers<[1], [0], [0], [1], [0, 0, 1, 1], [], []>} : vector<8x64xf32>, vector<64x128xf32>, vector<8x128xf32> -> vector<8x128xf32>
    %21 = arith.addf %19, %20 : vector<8x128xf32>
    %22 = vector.broadcast %11 : vector<1x128xf32> to vector<8x128xf32>
    %23 = arith.addf %21, %22 : vector<8x128xf32>
    %24 = tpu.iota {dimensions = array<i32: 1>} : vector<1x128xi32>
    %c64_i32 = arith.constant 64 : i32
    %25 = vector.broadcast %c64_i32 : i32 to vector<1x128xi32>
    %26 = arith.cmpi sge, %24, %25 : vector<1x128xi32>
    %c96_i32 = arith.constant 96 : i32
    %27 = vector.broadcast %c96_i32 : i32 to vector<1x128xi32>
    %28 = arith.cmpi slt, %24, %27 : vector<1x128xi32>
    %29 = arith.andi %26, %28 : vector<1x128xi1>
    %cst_19 = arith.constant 1.000000e+00 : f32
    %cst_20 = arith.constant 5.000000e-01 : f32
    %30 = vector.broadcast %cst_19 : f32 to vector<1x128xf32>
    %31 = vector.broadcast %cst_20 : f32 to vector<1x128xf32>
    %32 = arith.select %29, %30, %31 : vector<1x128xi1>, vector<1x128xf32>
    %cst_21 = arith.constant 0.000000e+00 : f32
    %cst_22 = arith.constant 5.000000e-01 : f32
    %33 = vector.broadcast %cst_21 : f32 to vector<1x128xf32>
    %34 = vector.broadcast %cst_22 : f32 to vector<1x128xf32>
    %35 = arith.select %29, %33, %34 : vector<1x128xi1>, vector<1x128xf32>
    %36 = vector.extract_strided_slice %23 {offsets = [0, 0], sizes = [1, 128], strides = [1, 1]} : vector<8x128xf32> to vector<1x128xf32>
    %cst_23 = arith.constant dense<0.000000e+00> : vector<1x128xf32>
    %37 = tpu.matmul %5, %10, %cst_23 {dimension_numbers = #tpu.dot_dimension_numbers<[1], [0], [0], [1], [0, 0, 1, 1], [], []>} : vector<1x32xf32>, vector<32x128xf32>, vector<1x128xf32> -> vector<1x128xf32>
    %38 = arith.addf %36, %37 : vector<1x128xf32>
    %39 = math.tanh %38 : vector<1x128xf32>
    %40 = arith.mulf %39, %32 : vector<1x128xf32>
    %41 = arith.addf %40, %35 : vector<1x128xf32>
    %42 = vector.extract_strided_slice %41 {offsets = [0, 0], sizes = [1, 32], strides = [1, 1]} : vector<1x128xf32> to vector<1x32xf32>
    %43 = vector.extract_strided_slice %41 {offsets = [0, 32], sizes = [1, 32], strides = [1, 1]} : vector<1x128xf32> to vector<1x32xf32>
    %44 = vector.extract_strided_slice %41 {offsets = [0, 64], sizes = [1, 32], strides = [1, 1]} : vector<1x128xf32> to vector<1x32xf32>
    %45 = vector.extract_strided_slice %41 {offsets = [0, 96], sizes = [1, 32], strides = [1, 1]} : vector<1x128xf32> to vector<1x32xf32>
    %46 = arith.mulf %43, %7 : vector<1x32xf32>
    %47 = arith.mulf %42, %44 : vector<1x32xf32>
    %48 = arith.addf %46, %47 : vector<1x32xf32>
    %49 = math.tanh %48 : vector<1x32xf32>
    %50 = arith.mulf %45, %49 : vector<1x32xf32>
    %51 = vector.extract_strided_slice %23 {offsets = [1, 0], sizes = [1, 128], strides = [1, 1]} : vector<8x128xf32> to vector<1x128xf32>
    %cst_24 = arith.constant dense<0.000000e+00> : vector<1x128xf32>
    %52 = tpu.matmul %50, %10, %cst_24 {dimension_numbers = #tpu.dot_dimension_numbers<[1], [0], [0], [1], [0, 0, 1, 1], [], []>} : vector<1x32xf32>, vector<32x128xf32>, vector<1x128xf32> -> vector<1x128xf32>
    %53 = arith.addf %51, %52 : vector<1x128xf32>
    %54 = math.tanh %53 : vector<1x128xf32>
    %55 = arith.mulf %54, %32 : vector<1x128xf32>
    %56 = arith.addf %55, %35 : vector<1x128xf32>
    %57 = vector.extract_strided_slice %56 {offsets = [0, 0], sizes = [1, 32], strides = [1, 1]} : vector<1x128xf32> to vector<1x32xf32>
    %58 = vector.extract_strided_slice %56 {offsets = [0, 32], sizes = [1, 32], strides = [1, 1]} : vector<1x128xf32> to vector<1x32xf32>
    %59 = vector.extract_strided_slice %56 {offsets = [0, 64], sizes = [1, 32], strides = [1, 1]} : vector<1x128xf32> to vector<1x32xf32>
    %60 = vector.extract_strided_slice %56 {offsets = [0, 96], sizes = [1, 32], strides = [1, 1]} : vector<1x128xf32> to vector<1x32xf32>
    %61 = arith.mulf %58, %48 : vector<1x32xf32>
    %62 = arith.mulf %57, %59 : vector<1x32xf32>
    %63 = arith.addf %61, %62 : vector<1x32xf32>
    %64 = math.tanh %63 : vector<1x32xf32>
    %65 = arith.mulf %60, %64 : vector<1x32xf32>
    %66 = vector.extract_strided_slice %23 {offsets = [2, 0], sizes = [1, 128], strides = [1, 1]} : vector<8x128xf32> to vector<1x128xf32>
    %cst_25 = arith.constant dense<0.000000e+00> : vector<1x128xf32>
    %67 = tpu.matmul %65, %10, %cst_25 {dimension_numbers = #tpu.dot_dimension_numbers<[1], [0], [0], [1], [0, 0, 1, 1], [], []>} : vector<1x32xf32>, vector<32x128xf32>, vector<1x128xf32> -> vector<1x128xf32>
    %68 = arith.addf %66, %67 : vector<1x128xf32>
    %69 = math.tanh %68 : vector<1x128xf32>
    %70 = arith.mulf %69, %32 : vector<1x128xf32>
    %71 = arith.addf %70, %35 : vector<1x128xf32>
    %72 = vector.extract_strided_slice %71 {offsets = [0, 0], sizes = [1, 32], strides = [1, 1]} : vector<1x128xf32> to vector<1x32xf32>
    %73 = vector.extract_strided_slice %71 {offsets = [0, 32], sizes = [1, 32], strides = [1, 1]} : vector<1x128xf32> to vector<1x32xf32>
    %74 = vector.extract_strided_slice %71 {offsets = [0, 64], sizes = [1, 32], strides = [1, 1]} : vector<1x128xf32> to vector<1x32xf32>
    %75 = vector.extract_strided_slice %71 {offsets = [0, 96], sizes = [1, 32], strides = [1, 1]} : vector<1x128xf32> to vector<1x32xf32>
    %76 = arith.mulf %73, %63 : vector<1x32xf32>
    %77 = arith.mulf %72, %74 : vector<1x32xf32>
    %78 = arith.addf %76, %77 : vector<1x32xf32>
    %79 = math.tanh %78 : vector<1x32xf32>
    %80 = arith.mulf %75, %79 : vector<1x32xf32>
    %81 = vector.extract_strided_slice %23 {offsets = [3, 0], sizes = [1, 128], strides = [1, 1]} : vector<8x128xf32> to vector<1x128xf32>
    %cst_26 = arith.constant dense<0.000000e+00> : vector<1x128xf32>
    %82 = tpu.matmul %80, %10, %cst_26 {dimension_numbers = #tpu.dot_dimension_numbers<[1], [0], [0], [1], [0, 0, 1, 1], [], []>} : vector<1x32xf32>, vector<32x128xf32>, vector<1x128xf32> -> vector<1x128xf32>
    %83 = arith.addf %81, %82 : vector<1x128xf32>
    %84 = math.tanh %83 : vector<1x128xf32>
    %85 = arith.mulf %84, %32 : vector<1x128xf32>
    %86 = arith.addf %85, %35 : vector<1x128xf32>
    %87 = vector.extract_strided_slice %86 {offsets = [0, 0], sizes = [1, 32], strides = [1, 1]} : vector<1x128xf32> to vector<1x32xf32>
    %88 = vector.extract_strided_slice %86 {offsets = [0, 32], sizes = [1, 32], strides = [1, 1]} : vector<1x128xf32> to vector<1x32xf32>
    %89 = vector.extract_strided_slice %86 {offsets = [0, 64], sizes = [1, 32], strides = [1, 1]} : vector<1x128xf32> to vector<1x32xf32>
    %90 = vector.extract_strided_slice %86 {offsets = [0, 96], sizes = [1, 32], strides = [1, 1]} : vector<1x128xf32> to vector<1x32xf32>
    %91 = arith.mulf %88, %78 : vector<1x32xf32>
    %92 = arith.mulf %87, %89 : vector<1x32xf32>
    %93 = arith.addf %91, %92 : vector<1x32xf32>
    %94 = math.tanh %93 : vector<1x32xf32>
    %95 = arith.mulf %90, %94 : vector<1x32xf32>
    %96 = vector.extract_strided_slice %23 {offsets = [4, 0], sizes = [1, 128], strides = [1, 1]} : vector<8x128xf32> to vector<1x128xf32>
    %cst_27 = arith.constant dense<0.000000e+00> : vector<1x128xf32>
    %97 = tpu.matmul %95, %10, %cst_27 {dimension_numbers = #tpu.dot_dimension_numbers<[1], [0], [0], [1], [0, 0, 1, 1], [], []>} : vector<1x32xf32>, vector<32x128xf32>, vector<1x128xf32> -> vector<1x128xf32>
    %98 = arith.addf %96, %97 : vector<1x128xf32>
    %99 = math.tanh %98 : vector<1x128xf32>
    %100 = arith.mulf %99, %32 : vector<1x128xf32>
    %101 = arith.addf %100, %35 : vector<1x128xf32>
    %102 = vector.extract_strided_slice %101 {offsets = [0, 0], sizes = [1, 32], strides = [1, 1]} : vector<1x128xf32> to vector<1x32xf32>
    %103 = vector.extract_strided_slice %101 {offsets = [0, 32], sizes = [1, 32], strides = [1, 1]} : vector<1x128xf32> to vector<1x32xf32>
    %104 = vector.extract_strided_slice %101 {offsets = [0, 64], sizes = [1, 32], strides = [1, 1]} : vector<1x128xf32> to vector<1x32xf32>
    %105 = vector.extract_strided_slice %101 {offsets = [0, 96], sizes = [1, 32], strides = [1, 1]} : vector<1x128xf32> to vector<1x32xf32>
    %106 = arith.mulf %103, %93 : vector<1x32xf32>
    %107 = arith.mulf %102, %104 : vector<1x32xf32>
    %108 = arith.addf %106, %107 : vector<1x32xf32>
    %109 = math.tanh %108 : vector<1x32xf32>
    %110 = arith.mulf %105, %109 : vector<1x32xf32>
    %111 = vector.extract_strided_slice %23 {offsets = [5, 0], sizes = [1, 128], strides = [1, 1]} : vector<8x128xf32> to vector<1x128xf32>
    %cst_28 = arith.constant dense<0.000000e+00> : vector<1x128xf32>
    %112 = tpu.matmul %110, %10, %cst_28 {dimension_numbers = #tpu.dot_dimension_numbers<[1], [0], [0], [1], [0, 0, 1, 1], [], []>} : vector<1x32xf32>, vector<32x128xf32>, vector<1x128xf32> -> vector<1x128xf32>
    %113 = arith.addf %111, %112 : vector<1x128xf32>
    %114 = math.tanh %113 : vector<1x128xf32>
    %115 = arith.mulf %114, %32 : vector<1x128xf32>
    %116 = arith.addf %115, %35 : vector<1x128xf32>
    %117 = vector.extract_strided_slice %116 {offsets = [0, 0], sizes = [1, 32], strides = [1, 1]} : vector<1x128xf32> to vector<1x32xf32>
    %118 = vector.extract_strided_slice %116 {offsets = [0, 32], sizes = [1, 32], strides = [1, 1]} : vector<1x128xf32> to vector<1x32xf32>
    %119 = vector.extract_strided_slice %116 {offsets = [0, 64], sizes = [1, 32], strides = [1, 1]} : vector<1x128xf32> to vector<1x32xf32>
    %120 = vector.extract_strided_slice %116 {offsets = [0, 96], sizes = [1, 32], strides = [1, 1]} : vector<1x128xf32> to vector<1x32xf32>
    %121 = arith.mulf %118, %108 : vector<1x32xf32>
    %122 = arith.mulf %117, %119 : vector<1x32xf32>
    %123 = arith.addf %121, %122 : vector<1x32xf32>
    %124 = math.tanh %123 : vector<1x32xf32>
    %125 = arith.mulf %120, %124 : vector<1x32xf32>
    %126 = vector.extract_strided_slice %23 {offsets = [6, 0], sizes = [1, 128], strides = [1, 1]} : vector<8x128xf32> to vector<1x128xf32>
    %cst_29 = arith.constant dense<0.000000e+00> : vector<1x128xf32>
    %127 = tpu.matmul %125, %10, %cst_29 {dimension_numbers = #tpu.dot_dimension_numbers<[1], [0], [0], [1], [0, 0, 1, 1], [], []>} : vector<1x32xf32>, vector<32x128xf32>, vector<1x128xf32> -> vector<1x128xf32>
    %128 = arith.addf %126, %127 : vector<1x128xf32>
    %129 = math.tanh %128 : vector<1x128xf32>
    %130 = arith.mulf %129, %32 : vector<1x128xf32>
    %131 = arith.addf %130, %35 : vector<1x128xf32>
    %132 = vector.extract_strided_slice %131 {offsets = [0, 0], sizes = [1, 32], strides = [1, 1]} : vector<1x128xf32> to vector<1x32xf32>
    %133 = vector.extract_strided_slice %131 {offsets = [0, 32], sizes = [1, 32], strides = [1, 1]} : vector<1x128xf32> to vector<1x32xf32>
    %134 = vector.extract_strided_slice %131 {offsets = [0, 64], sizes = [1, 32], strides = [1, 1]} : vector<1x128xf32> to vector<1x32xf32>
    %135 = vector.extract_strided_slice %131 {offsets = [0, 96], sizes = [1, 32], strides = [1, 1]} : vector<1x128xf32> to vector<1x32xf32>
    %136 = arith.mulf %133, %123 : vector<1x32xf32>
    %137 = arith.mulf %132, %134 : vector<1x32xf32>
    %138 = arith.addf %136, %137 : vector<1x32xf32>
    %139 = math.tanh %138 : vector<1x32xf32>
    %140 = arith.mulf %135, %139 : vector<1x32xf32>
    %141 = vector.extract_strided_slice %23 {offsets = [7, 0], sizes = [1, 128], strides = [1, 1]} : vector<8x128xf32> to vector<1x128xf32>
    %cst_30 = arith.constant dense<0.000000e+00> : vector<1x128xf32>
    %142 = tpu.matmul %140, %10, %cst_30 {dimension_numbers = #tpu.dot_dimension_numbers<[1], [0], [0], [1], [0, 0, 1, 1], [], []>} : vector<1x32xf32>, vector<32x128xf32>, vector<1x128xf32> -> vector<1x128xf32>
    %143 = arith.addf %141, %142 : vector<1x128xf32>
    %144 = math.tanh %143 : vector<1x128xf32>
    %145 = arith.mulf %144, %32 : vector<1x128xf32>
    %146 = arith.addf %145, %35 : vector<1x128xf32>
    %147 = vector.extract_strided_slice %146 {offsets = [0, 0], sizes = [1, 32], strides = [1, 1]} : vector<1x128xf32> to vector<1x32xf32>
    %148 = vector.extract_strided_slice %146 {offsets = [0, 32], sizes = [1, 32], strides = [1, 1]} : vector<1x128xf32> to vector<1x32xf32>
    %149 = vector.extract_strided_slice %146 {offsets = [0, 64], sizes = [1, 32], strides = [1, 1]} : vector<1x128xf32> to vector<1x32xf32>
    %150 = vector.extract_strided_slice %146 {offsets = [0, 96], sizes = [1, 32], strides = [1, 1]} : vector<1x128xf32> to vector<1x32xf32>
    %151 = arith.mulf %148, %138 : vector<1x32xf32>
    %152 = arith.mulf %147, %149 : vector<1x32xf32>
    %153 = arith.addf %151, %152 : vector<1x32xf32>
    %154 = math.tanh %153 : vector<1x32xf32>
    %155 = arith.mulf %150, %154 : vector<1x32xf32>
    %156 = tpu.concatenate %50, %65, %80, %95, %110, %125, %140, %155 in 0 : vector<1x32xf32>, vector<1x32xf32>, vector<1x32xf32>, vector<1x32xf32>, vector<1x32xf32>, vector<1x32xf32>, vector<1x32xf32>, vector<1x32xf32> -> vector<8x32xf32>
    %cst_31 = arith.constant dense<0.000000e+00> : vector<8x128xf32>
    %157 = tpu.matmul %156, %12, %cst_31 {dimension_numbers = #tpu.dot_dimension_numbers<[1], [0], [0], [1], [0, 0, 1, 1], [], []>} : vector<8x32xf32>, vector<32x128xf32>, vector<8x128xf32> -> vector<8x128xf32>
    %158 = vector.broadcast %13 : vector<1x128xf32> to vector<8x128xf32>
    %159 = arith.addf %157, %158 : vector<8x128xf32>
    %c0_32 = arith.constant 0 : index
    %c0_33 = arith.constant 0 : index
    %c0_34 = arith.constant 0 : index
    %160 = vector.load %arg6[%c0_32, %c0_33, %c0_34] : memref<1x8x128xf32, #tpu.memory_space<vmem>>, vector<1x8x128xf32>
    %161 = vector.shape_cast %160 : vector<1x8x128xf32> to vector<8x128xf32>
    %162 = vector.shape_cast %159 : vector<8x128xf32> to vector<1x8x128xf32>
    tpu.vector_store %arg6[%c0_32, %c0_33, %c0_34], %162 {strides = array<i32>} : memref<1x8x128xf32, #tpu.memory_space<vmem>>, vector<1x8x128xf32>,
    %c0_35 = arith.constant 0 : index
    %c0_36 = arith.constant 0 : index
    %c0_37 = arith.constant 0 : index
    %163 = vector.load %arg7[%c0_35, %c0_36, %c0_37] : memref<1x1x32xf32, #tpu.memory_space<vmem>>, vector<1x1x32xf32>
    %164 = vector.shape_cast %163 : vector<1x1x32xf32> to vector<1x32xf32>
    %165 = vector.shape_cast %153 : vector<1x32xf32> to vector<1x1x32xf32>
    tpu.vector_store %arg7[%c0_35, %c0_36, %c0_37], %165 {strides = array<i32>} : memref<1x1x32xf32, #tpu.memory_space<vmem>>, vector<1x1x32xf32>,
    return
  }
  func.func @transform_0(%arg0: i32) -> (i32, i32, i32) {
    %c0_i32 = arith.constant 0 : i32
    %c0_i32_0 = arith.constant 0 : i32
    %c0_i32_1 = arith.constant 0 : i32
    return %arg0, %c0_i32, %c0_i32_0 : i32, i32, i32
  }
  func.func @transform_1(%arg0: i32) -> (i32, i32, i32) {
    %c0_i32 = arith.constant 0 : i32
    %c0_i32_0 = arith.constant 0 : i32
    %c0_i32_1 = arith.constant 0 : i32
    return %arg0, %c0_i32, %c0_i32_0 : i32, i32, i32
  }
  func.func @transform_2(%arg0: i32) -> (i32, i32, i32) {
    %c0_i32 = arith.constant 0 : i32
    %c0_i32_0 = arith.constant 0 : i32
    %c0_i32_1 = arith.constant 0 : i32
    return %arg0, %c0_i32, %c0_i32_0 : i32, i32, i32
  }
  func.func @transform_3(%arg0: i32) -> (i32, i32, i32) {
    %c0_i32 = arith.constant 0 : i32
    %c0_i32_0 = arith.constant 0 : i32
    %c0_i32_1 = arith.constant 0 : i32
    return %arg0, %c0_i32, %c0_i32_0 : i32, i32, i32
  }
  func.func @transform_4(%arg0: i32) -> (i32, i32) {
    %c0_i32 = arith.constant 0 : i32
    %c0_i32_0 = arith.constant 0 : i32
    %c0_i32_1 = arith.constant 0 : i32
    return %c0_i32, %c0_i32_0 : i32, i32
  }
  func.func @transform_5(%arg0: i32) -> (i32, i32, i32) {
    %c0_i32 = arith.constant 0 : i32
    %c0_i32_0 = arith.constant 0 : i32
    %c0_i32_1 = arith.constant 0 : i32
    return %arg0, %c0_i32, %c0_i32_0 : i32, i32, i32
  }
  func.func @transform_6(%arg0: i32) -> (i32, i32, i32) {
    %c0_i32 = arith.constant 0 : i32
    %c0_i32_0 = arith.constant 0 : i32
    %c0_i32_1 = arith.constant 0 : i32
    return %arg0, %c0_i32, %c0_i32_0 : i32, i32, i32
  }
}

</mosaic_0001>

<llo_original>
// kernel: decoder_forward.1
$region0: #{decoder_forward.1}
  #allocation0 [shape = 'u32[]', space=smem, size = 0x4, offset = 0x4, fixed_abs, tag = 'smem constant byte address 0x4 - core index']
  #allocation1 [shape = 'u32[72,128]{1,0:T(1,128)}', space=vmem, size = 0x9000, scoped, tag = 'internal scratch']
  %s0 = inlined_call_operand.vmem [shape: s32[2,8,1], index: 0, kind: input, shape index: {}]
  %s1 = inlined_call_operand.vmem [shape: f32[2,8,64], index: 1, kind: input, shape index: {}]
  %s2 = inlined_call_operand.vmem [shape: f32[2,1,32], index: 2, kind: input, shape index: {}]
  %s3 = inlined_call_operand.hbm [shape: f32[2,1,32], index: 3, kind: input, shape index: {}]
  %s4 = inlined_call_operand.hbm [shape: f32[160,128], index: 4, kind: input, shape index: {}]
  %s5 = inlined_call_operand.hbm [shape: f32[2,8,128], index: 5, kind: output, shape index: {0}]
  %s6 = inlined_call_operand.hbm [shape: f32[2,1,32], index: 6, kind: output, shape index: {1}]
  %7 = xla_tuple %s5, %s6
  %s8 = sld [smem:[#allocation0]]
  $region69: #{decoder_forward.1} parent=0
    _
  %s10 = ssub.s32 1, %s8
  %s11 = scalar_select 0, %s10, %s8
  $region1: #{decoder_forward.1} parent=0
    #allocation2 [shape = 'u8[1024]{0}', space=vmem, size = 0x400, scoped, tag = 'input window, operand 3']
    #allocation3 [shape = 's32[2]{0}', space=sflag, size = 0x8, scoped, tag = 'scoped memory for decoder_forward.1']
    #allocation4 [shape = 's32[2]{0}', space=sflag, size = 0x8, scoped, tag = 'scoped memory for decoder_forward.1']
    #allocation5 [shape = 'u8[81920]{0}', space=vmem, size = 0x14000, scoped, tag = 'input window, operand 4, single buffered']
    #allocation6 [shape = 's32[1]{0}', space=sflag, size = 0x4, scoped, tag = 'scoped memory for decoder_forward.1']
    #allocation7 [shape = 'u8[8192]{0}', space=vmem, size = 0x2000, scoped, tag = 'output window, operand 0']
    #allocation8 [shape = 'u8[1024]{0}', space=vmem, size = 0x400, scoped, tag = 'output window, operand 1']
    #allocation9 [shape = 's32[2]{0}', space=sflag, size = 0x8, scoped, tag = 'scoped memory for decoder_forward.1']
    %12 = vsyncpa [#allocation3], 0
    %s13 = scalar_lea.sflag [#allocation3], 1
    %14 = vsyncpa %s13, 0
    %15 = vsyncpa [#allocation6], 0
    %16 = vsyncpa [#allocation4], 0
    %s17 = scalar_lea.sflag [#allocation4], 1
    %18 = vsyncpa %s17, 0
    %19 = vsyncpa [#allocation9], 0
    %s20 = scalar_lea.sflag [#allocation9], 1
    %21 = vsyncpa %s20, 0
    loop: start=0, step=1, limit=4
    $region2: #{decoder_forward.1} parent=1 // loop_pre_header
      _
    $region3: #{decoder_forward.1} parent=1 // loop_header
      %s23 = sphi 0, %s27
      %p24 = scmp.ge.s32.totalorder %s23, 4
      %s33 = sphi 0, %s35
      %s36 = sphi 0, %s33
      %s37 = sphi 0, %s36
      %s53 = sphi 0, %s37
      %s59 = sphi 0, %s61
      %s62 = sphi 0, %s59
      %s63 = sphi 0, %s62
      %s79 = sphi 0, %s63
      %s85 = sphi 0, %s87
      %s88 = sphi 0, %s85
      %s89 = sphi 0, %s88
      %s105 = sphi 0, %s89
      %s111 = sphi 0, %s113
      %s114 = sphi 0, %s111
      %s115 = sphi 0, %s114
      %s131 = sphi 0, %s115
      %s135 = sphi 0, %s135
      %s137 = sphi 0, %s135
      %s138 = sphi 0, %s137
      %s152 = sphi 0, %s138
      %s158 = sphi 0, %s160
      %s161 = sphi 0, %s158
      %s162 = sphi 0, %s161
      %s178 = sphi 0, %s162
      %s184 = sphi 0, %s186
      %s187 = sphi 0, %s184
      %s188 = sphi 0, %s187
      %s204 = sphi 0, %s188
    $region4: #{decoder_forward.1} parent=1 // loop_header_branch
      %26 = sbr.rel (%p24) target = $region8
    $region5: #{decoder_forward.1} parent=1 // loop_body
      %s28 = ssub.s32 %s23, 1
      %s29 = ssub.s32 %s23, 2
      %s30 = sadd.s32 %s23, 1
      %s31 = ssub.s32 %s23, %s30
      %p32 = scmp.eq.s32.totalorder %s31, 0
      %s34 = sadd.s32 %s33, 1
      %s35 = scalar_select %p32, %s33, %s34
      %p38 = pneg %p32
      %p39 = scmp.eq.s32.totalorder %s23, 1
      %p40 = por %p38, %p39
      %p41 = scmp.ne.s32.totalorder %s33, %s36
      %p42 = scmp.eq.s32.totalorder %s23, 0
      %p43 = por %p41, %p42
      %p44 = scmp.ne.s32.totalorder %s33, %s36
      %p45 = scmp.eq.s32.totalorder %s28, 1
      %p46 = por %p44, %p45
      %p47 = scmp.ne.s32.totalorder %s36, %s37
      %p48 = scmp.eq.s32.totalorder %s28, 0
      %p49 = por %p47, %p48
      %p50 = scmp.ne.s32.totalorder %s36, %s37
      %p51 = scmp.eq.s32.totalorder %s29, 1
      %p52 = por %p50, %p51
      %p54 = scmp.ne.s32.totalorder %s37, %s53
      %p55 = scmp.eq.s32.totalorder %s29, 0
      %p56 = por %p54, %p55
      %s57 = ssub.s32 %s23, %s30
      %p58 = scmp.eq.s32.totalorder %s57, 0
      %s60 = sadd.s32 %s59, 1
      %s61 = scalar_select %p58, %s59, %s60
      %p64 = pneg %p58
      %p65 = scmp.eq.s32.totalorder %s23, 1
      %p66 = por %p64, %p65
      %p67 = scmp.ne.s32.totalorder %s59, %s62
      %p68 = scmp.eq.s32.totalorder %s23, 0
      %p69 = por %p67, %p68
      %p70 = scmp.ne.s32.totalorder %s59, %s62
      %p71 = scmp.eq.s32.totalorder %s28, 1
      %p72 = por %p70, %p71
      %p73 = scmp.ne.s32.totalorder %s62, %s63
      %p74 = scmp.eq.s32.totalorder %s28, 0
      %p75 = por %p73, %p74
      %p76 = scmp.ne.s32.totalorder %s62, %s63
      %p77 = scmp.eq.s32.totalorder %s29, 1
      %p78 = por %p76, %p77
      %p80 = scmp.ne.s32.totalorder %s63, %s79
      %p81 = scmp.eq.s32.totalorder %s29, 0
      %p82 = por %p80, %p81
      %s83 = ssub.s32 %s23, %s30
      %p84 = scmp.eq.s32.totalorder %s83, 0
      %s86 = sadd.s32 %s85, 1
      %s87 = scalar_select %p84, %s85, %s86
      %p90 = pneg %p84
      %p91 = scmp.eq.s32.totalorder %s23, 1
      %p92 = por %p90, %p91
      %p93 = scmp.ne.s32.totalorder %s85, %s88
      %p94 = scmp.eq.s32.totalorder %s23, 0
      %p95 = por %p93, %p94
      %p96 = scmp.ne.s32.totalorder %s85, %s88
      %p97 = scmp.eq.s32.totalorder %s28, 1
      %p98 = por %p96, %p97
      %p99 = scmp.ne.s32.totalorder %s88, %s89
      %p100 = scmp.eq.s32.totalorder %s28, 0
      %p101 = por %p99, %p100
      %p102 = scmp.ne.s32.totalorder %s88, %s89
      %p103 = scmp.eq.s32.totalorder %s29, 1
      %p104 = por %p102, %p103
      %p106 = scmp.ne.s32.totalorder %s89, %s105
      %p107 = scmp.eq.s32.totalorder %s29, 0
      %p108 = por %p106, %p107
      %s109 = ssub.s32 %s23, %s30
      %p110 = scmp.eq.s32.totalorder %s109, 0
      %s112 = sadd.s32 %s111, 1
      %s113 = scalar_select %p110, %s111, %s112
      %p116 = pneg %p110
      %p117 = scmp.eq.s32.totalorder %s23, 1
      %p118 = por %p116, %p117
      %p119 = scmp.ne.s32.totalorder %s111, %s114
      %p120 = scmp.eq.s32.totalorder %s23, 0
      %p121 = por %p119, %p120
      %p122 = scmp.ne.s32.totalorder %s111, %s114
      %p123 = scmp.eq.s32.totalorder %s28, 1
      %p124 = por %p122, %p123
      %p125 = scmp.ne.s32.totalorder %s114, %s115
      %p126 = scmp.eq.s32.totalorder %s28, 0
      %p127 = por %p125, %p126
      %p128 = scmp.ne.s32.totalorder %s114, %s115
      %p129 = scmp.eq.s32.totalorder %s29, 1
      %p130 = por %p128, %p129
      %p132 = scmp.ne.s32.totalorder %s115, %s131
      %p133 = scmp.eq.s32.totalorder %s29, 0
      %p134 = por %p132, %p133
      %s136 = sadd.s32 %s135, 1
      %p139 = scmp.eq.s32.totalorder %s23, 1
      %p140 = scmp.ne.s32.totalorder %s135, %s137
      %p141 = scmp.eq.s32.totalorder %s23, 0
      %p142 = por %p140, %p141
      %p143 = scmp.ne.s32.totalorder %s135, %s137
      %p144 = scmp.eq.s32.totalorder %s28, 1
      %p145 = por %p143, %p144
      %p146 = scmp.ne.s32.totalorder %s137, %s138
      %p147 = scmp.eq.s32.totalorder %s28, 0
      %p148 = por %p146, %p147
      %p149 = scmp.ne.s32.totalorder %s137, %s138
      %p150 = scmp.eq.s32.totalorder %s29, 1
      %p151 = por %p149, %p150
      %p153 = scmp.ne.s32.totalorder %s138, %s152
      %p154 = scmp.eq.s32.totalorder %s29, 0
      %p155 = por %p153, %p154
      %s156 = ssub.s32 %s23, %s30
      %p157 = scmp.eq.s32.totalorder %s156, 0
      %s159 = sadd.s32 %s158, 1
      %s160 = scalar_select %p157, %s158, %s159
      %p163 = pneg %p157
      %p164 = scmp.eq.s32.totalorder %s23, 1
      %p165 = por %p163, %p164
      %p166 = scmp.ne.s32.totalorder %s158, %s161
      %p167 = scmp.eq.s32.totalorder %s23, 0
      %p168 = por %p166, %p167
      %p169 = scmp.ne.s32.totalorder %s158, %s161
      %p170 = scmp.eq.s32.totalorder %s28, 1
      %p171 = por %p169, %p170
      %p172 = scmp.ne.s32.totalorder %s161, %s162
      %p173 = scmp.eq.s32.totalorder %s28, 0
      %p174 = por %p172, %p173
      %p175 = scmp.ne.s32.totalorder %s161, %s162
      %p176 = scmp.eq.s32.totalorder %s29, 1
      %p177 = por %p175, %p176
      %p179 = scmp.ne.s32.totalorder %s162, %s178
      %p180 = scmp.eq.s32.totalorder %s29, 0
      %p181 = por %p179, %p180
      %s182 = ssub.s32 %s23, %s30
      %p183 = scmp.eq.s32.totalorder %s182, 0
      %s185 = sadd.s32 %s184, 1
      %s186 = scalar_select %p183, %s184, %s185
      %p189 = pneg %p183
      %p190 = scmp.eq.s32.totalorder %s23, 1
      %p191 = por %p189, %p190
      %p192 = scmp.ne.s32.totalorder %s184, %s187
      %p193 = scmp.eq.s32.totalorder %s23, 0
      %p194 = por %p192, %p193
      %p195 = scmp.ne.s32.totalorder %s184, %s187
      %p196 = scmp.eq.s32.totalorder %s28, 1
      %p197 = por %p195, %p196
      %p198 = scmp.ne.s32.totalorder %s187, %s188
      %p199 = scmp.eq.s32.totalorder %s28, 0
      %p200 = por %p198, %p199
      %p201 = scmp.ne.s32.totalorder %s187, %s188
      %p202 = scmp.eq.s32.totalorder %s29, 1
      %p203 = por %p201, %p202
      %p205 = scmp.ne.s32.totalorder %s188, %s204
      %p206 = scmp.eq.s32.totalorder %s29, 0
      %p207 = por %p205, %p206
      %p208 = scmp.le.s32.totalorder 1, %s23
      %p209 = scmp.lt.s32.totalorder %s23, 3
      %p210 = pnand %p208, %p209
      %p211 = pneg %p210
      // Predicated region
      $region9: #{decoder_forward.1} parent=5 // pred_check
        _
      $region10: #{decoder_forward.1} parent=5 // pred_check_branch
        %213 = sbr.rel (%p210) target = $region12
      $region11: #{decoder_forward.1} parent=5 // pred_region
        %s214 = ssub.s32 %s23, 1
        // Predicated region
        $region13: #{decoder_forward.1} parent=11 // pred_check
          %p215 = pneg %p148
        $region14: #{decoder_forward.1} parent=11 // pred_check_branch
          %217 = sbr.rel (%p215) target = $region16
        $region15: #{decoder_forward.1} parent=11 // pred_region
          %219 = vsyncadd [#allocation6], 0
          %s220 = sshll.u32 %s4, 4
          %s221 = int_to_ptr.hbm [resolvable:$true] %s220
          %s222 = sshll.u32 [#allocation5], 4
          %s223 = int_to_ptr.vmem [resolvable:$true] %s222
          %228 = dma.hbm_to_vmem [thread:$0]  %s221, 2560, %s223, [#allocation6], 128, 128, 8
        $region16: #{decoder_forward.1} parent=11 // pred_fallthru
          _
      $region12: #{decoder_forward.1} parent=5 // pred_fallthru
        _
      %p229 = scmp.lt.s32.totalorder %s23, 2
      // Predicated region
      $region17: #{decoder_forward.1} parent=5 // pred_check
        %p230 = pneg %p229
      $region18: #{decoder_forward.1} parent=5 // pred_check_branch
        %232 = sbr.rel (%p230) target = $region20
      $region19: #{decoder_forward.1} parent=5 // pred_region
        // Predicated region
        $region21: #{decoder_forward.1} parent=19 // pred_check
          %p233 = pneg %p43
        $region22: #{decoder_forward.1} parent=19 // pred_check_branch
          %235 = sbr.rel (%p233) target = $region24
        $region23: #{decoder_forward.1} parent=19 // pred_region
          %p236 = scmp.lt.s32.totalorder %s23, 1
          %s237 = scalar_select %p236, %s23, 1
          %s238 = smul.addr %s237, 8
          %s239 = scalar_lea.vmem %s0, %s238
        $region24: #{decoder_forward.1} parent=19 // pred_fallthru
          _
        // Predicated region
        $region25: #{decoder_forward.1} parent=19 // pred_check
          %p240 = pneg %p69
        $region26: #{decoder_forward.1} parent=19 // pred_check_branch
          %242 = sbr.rel (%p240) target = $region28
        $region27: #{decoder_forward.1} parent=19 // pred_region
          %p243 = scmp.lt.s32.totalorder %s23, 1
          %s244 = scalar_select %p243, %s23, 1
          %s245 = smul.addr %s244, 8
          %s246 = scalar_lea.vmem %s1, %s245
        $region28: #{decoder_forward.1} parent=19 // pred_fallthru
          _
        // Predicated region
        $region29: #{decoder_forward.1} parent=19 // pred_check
          %p247 = pneg %p95
        $region30: #{decoder_forward.1} parent=19 // pred_check_branch
          %249 = sbr.rel (%p247) target = $region32
        $region31: #{decoder_forward.1} parent=19 // pred_region
          %p250 = scmp.lt.s32.totalorder %s23, 1
          %s251 = scalar_select %p250, %s23, 1
          %s252 = scalar_lea.vmem %s2, %s251
        $region32: #{decoder_forward.1} parent=19 // pred_fallthru
          _
        // Predicated region
        $region33: #{decoder_forward.1} parent=19 // pred_check
          %p253 = pneg %p121
        $region34: #{decoder_forward.1} parent=19 // pred_check_branch
          %255 = sbr.rel (%p253) target = $region36
        $region35: #{decoder_forward.1} parent=19 // pred_region
          %s256 = sand.u32 %s111, 1
          %s257 = scalar_lea.sflag [#allocation3], %s256
          %s258 = sand.u32 %s111, 1
          %s259 = scalar_lea.vmem [#allocation2], %s258
          %261 = vsyncadd %s257, 0
          %s262 = scalar_lea.hbm %s3, %s23
          %s264 = sshll.u32 %s262, 4
          %s265 = int_to_ptr.hbm [resolvable:$true] %s264
          %s266 = sshll.u32 %s259, 4
          %s267 = int_to_ptr.vmem [resolvable:$true] %s266
          %269 = dma.hbm_to_vmem [thread:$0]  %s265, 16, %s267, %s257
        $region36: #{decoder_forward.1} parent=19 // pred_fallthru
          _
      $region20: #{decoder_forward.1} parent=5 // pred_fallthru
        _
      %p270 = scmp.le.s32.totalorder 1, %s23
      %p271 = scmp.lt.s32.totalorder %s23, 3
      %p272 = pnand %p270, %p271
      %p273 = pneg %p272
      // Predicated region
      $region37: #{decoder_forward.1} parent=5 // pred_check
        _
      $region38: #{decoder_forward.1} parent=5 // pred_check_branch
        %275 = sbr.rel (%p272) target = $region40
      $region39: #{decoder_forward.1} parent=5 // pred_region
        %s276 = ssub.s32 %s23, 1
        %s277 = sand.u32 %s114, 1
        %s278 = scalar_lea.sflag [#allocation3], %s277
        %s279 = sand.u32 %s114, 1
        %s280 = scalar_lea.vmem [#allocation2], %s279
        // Predicated region
        $region41: #{decoder_forward.1} parent=39 // pred_check
          %p281 = pneg %p127
        $region42: #{decoder_forward.1} parent=39 // pred_check_branch
          %283 = sbr.rel (%p281) target = $region44
        $region43: #{decoder_forward.1} parent=39 // pred_region
          %285 = dma.done %s278, 16
        $region44: #{decoder_forward.1} parent=39 // pred_fallthru
          _
        // Predicated region
        $region45: #{decoder_forward.1} parent=39 // pred_check
          %p286 = pneg %p148
        $region46: #{decoder_forward.1} parent=39 // pred_check_branch
          %288 = sbr.rel (%p286) target = $region48
        $region47: #{decoder_forward.1} parent=39 // pred_region
          %290 = dma.done [#allocation6], 2560
        $region48: #{decoder_forward.1} parent=39 // pred_fallthru
          _
        %p291 = scmp.lt.s32.totalorder %s28, 1
        %s292 = scalar_select %p291, %s28, 1
        %s293 = smul.addr %s292, 8
        %s294 = scalar_lea.vmem %s0, %s293
        %p295 = pneg %p49
        %p296 = pneg %p46
        %p297 = scmp.lt.s32.totalorder %s28, 1
        %s298 = scalar_select %p297, %s28, 1
        %s299 = smul.addr %s298, 8
        %s300 = scalar_lea.vmem %s1, %s299
        %p301 = pneg %p75
        %p302 = pneg %p72
        %p303 = scmp.lt.s32.totalorder %s28, 1
        %s304 = scalar_select %p303, %s28, 1
        %s305 = scalar_lea.vmem %s2, %s304
        %p306 = pneg %p101
        %p307 = pneg %p98
        %s308 = sand.u32 %s114, 1
        %s309 = scalar_lea.sflag [#allocation3], %s308
        %s310 = sand.u32 %s114, 1
        %s311 = scalar_lea.vmem [#allocation2], %s310
        %p312 = pneg %p127
        %p313 = pneg %p124
        %p314 = pneg %p148
        %p315 = pneg %p145
        %p316 = pneg %p174
        %p317 = pneg %p171
        %s318 = sand.u32 %s161, 1
        %s319 = scalar_lea.sflag [#allocation4], %s318
        %s320 = sand.u32 %s161, 1
        %s321 = smul.addr %s320, 8
        %s322 = scalar_lea.vmem [#allocation7], %s321
        %p323 = pneg %p200
        %p324 = pneg %p197
        %s325 = sand.u32 %s187, 1
        %s326 = scalar_lea.sflag [#allocation9], %s325
        %s327 = sand.u32 %s187, 1
        %s328 = scalar_lea.vmem [#allocation8], %s327
        %p329 = scmp.lt.s32.totalorder %s28, 1
        %s330 = scalar_select %p329, %s28, 1
        %s331 = smul.addr %s330, 8
        %s332 = scalar_lea.vmem %s0, %s331
        %p333 = scmp.lt.s32.totalorder %s28, 1
        %s334 = scalar_select %p333, %s28, 1
        %s335 = smul.addr %s334, 8
        %s336 = scalar_lea.vmem %s1, %s335
        %p337 = scmp.lt.s32.totalorder %s28, 1
        %s338 = scalar_select %p337, %s28, 1
        %s339 = scalar_lea.vmem %s2, %s338
        %v340 = vld [vmem:[%s332] sm:$0xff]
        %v341 = vld [vmem:[%s336] sm:$0xff]
        %v342 = vld [vmem:[%s339] sm:$0x1]
        %v343 = vld [vmem:[%s280] sm:$0x1]
        %v344 = vld [vmem:[#allocation5] sm:$0xff]
        %v345 = vld [vmem:[#allocation5 + $0x8] sm:$0xff]
        %v346 = vld [vmem:[#allocation5 + $0x10] sm:$0xff]
        %v347 = vld [vmem:[#allocation5 + $0x18] sm:$0xff]
        %v348 = vld [vmem:[#allocation5 + $0x20] sm:$0xff]
        %v349 = vld [vmem:[#allocation5 + $0x28] sm:$0xff]
        %v350 = vld [vmem:[#allocation5 + $0x30] sm:$0xff]
        %v351 = vld [vmem:[#allocation5 + $0x38] sm:$0xff]
        %v352 = vld [vmem:[#allocation5 + $0x40] sm:$0xff]
        %v353 = vld [vmem:[#allocation5 + $0x48] sm:$0xff]
        %v354 = vld [vmem:[#allocation5 + $0x50] sm:$0xff]
        %v355 = vld [vmem:[#allocation5 + $0x58] sm:$0xff]
        %v356 = vld [vmem:[#allocation5 + $0x60] sm:$0xff]
        %v357 = vld [vmem:[#allocation5 + $0x68] sm:$0xff]
        %v358 = vld [vmem:[#allocation5 + $0x70] sm:$0x1]
        %v359 = vld [vmem:[#allocation5 + $0x78] sm:$0xff]
        %v360 = vld [vmem:[#allocation5 + $0x80] sm:$0xff]
        %v361 = vld [vmem:[#allocation5 + $0x88] sm:$0xff]
        %v362 = vld [vmem:[#allocation5 + $0x90] sm:$0xff]
        %v363 = vld [vmem:[#allocation5 + $0x98] sm:$0x1]
        %v364 = vlaneseq
        %v365 = vand.u32 %v364, 127
        %366 = vset.pattern.permute.xlu0 0
        %367 = vperm.xlu0 %366, %v340
        %v368 = vpop.permute.xlu0 %367
        %vm369 = vcmp.eq.s32.totalorder %v365, %v368
        %v370 = vsel %vm369, 1, 0
        %v371 = vcvt.s32.f32 %v370
        %vm372 = vcmask 523264
        %v374 = vsel %vm372, %v341, 0
        %376 = vmatpush.msra.mxu0 0.0
        %377 = vmatpush.msra.mxu0 0.0
        %378 = vmatpush.msra.mxu0 0.0
        %379 = vmatpush.msra.mxu0 0.0
        %380 = vmatpush.msra.mxu0 0.0
        %381 = vmatpush.msra.mxu0 0.0
        %382 = vmatpush.msra.mxu0 0.0
        %383 = vmatpush.msra.mxu0 0.0
        %384 = vmatpush.msra.mxu0 %v353
        %385 = vmatpush.msra.mxu0 %v352
        %386 = vmatpush.msra.mxu0 %v351
        %387 = vmatpush.msra.mxu0 %v350
        %388 = vmatpush.msra.mxu0 %v349
        %389 = vmatpush.msra.mxu0 %v348
        %390 = vmatpush.msra.mxu0 %v347
        %391 = vmatpush.msra.mxu0 %v346
        %392 = vmatmul.f32.gmra.mxu0 %v374
        %v393 = vpop.f32.mrf.mxu0
        %v394 = vadd.f32 0.0, %v393
        %395 = vdwg.mxu0
        %vm396 = vcmask 130048
        %v398 = vsel %vm396, %v371, 0
        %400 = vmatpush.msra.mxu0 0.0
        %401 = vmatpush.msra.mxu0 0.0
        %402 = vmatpush.msra.mxu0 0.0
        %403 = vmatpush.msra.mxu0 0.0
        %404 = vmatpush.msra.mxu0 0.0
        %405 = vmatpush.msra.mxu0 0.0
        %406 = vmatpush.msra.mxu0 0.0
        %407 = vmatpush.msra.mxu0 0.0
        %408 = vmatpush.msra.mxu0 0.0
        %409 = vmatpush.msra.mxu0 0.0
        %410 = vmatpush.msra.mxu0 0.0
        %411 = vmatpush.msra.mxu0 0.0
        %412 = vmatpush.msra.mxu0 0.0
        %413 = vmatpush.msra.mxu0 0.0
        %414 = vmatpush.msra.mxu0 %v345
        %415 = vmatpush.msra.mxu0 %v344
        %416 = vmatmul.f32.gmra.mxu0 %v398
        %v417 = vpop.f32.mrf.mxu0
        %v418 = vadd.f32 %v394, %v417
        %419 = vdwg.mxu0
        %v420 = vperm.slane %v358, 0
        %v421 = vadd.f32 %v418, %v420
        %vm422 = vcmp.ge.s32.totalorder %v365, 64
        %vm423 = vcmp.lt.s32.totalorder %v365, 96
        %vm424 = vmand %vm422, %vm423
        %v425 = vsel %vm424, 1.0, 0.5
        %v426 = vsel %vm424, 0.0, 0.5
        %vm427 = vcmask 261120
        %v429 = vsel %vm427, %v342, 0
        %431 = vmatpush.msra.mxu0 0.0
        %432 = vmatpush.msra.mxu0 0.0
        %433 = vmatpush.msra.mxu0 0.0
        %434 = vmatpush.msra.mxu0 0.0
        %435 = vmatpush.msra.mxu0 0.0
        %436 = vmatpush.msra.mxu0 0.0
        %437 = vmatpush.msra.mxu0 0.0
        %438 = vmatpush.msra.mxu0 0.0
        %439 = vmatpush.msra.mxu0 0.0
        %440 = vmatpush.msra.mxu0 0.0
        %441 = vmatpush.msra.mxu0 0.0
        %442 = vmatpush.msra.mxu0 0.0
        %443 = vmatpush.msra.mxu0 %v357
        %444 = vmatpush.msra.mxu0 %v356
        %445 = vmatpush.msra.mxu0 %v355
        %446 = vmatpush.msra.mxu0 %v354
        %447 = vmatmul.f32.gmra.mxu0 %v429
        %v448 = vpop.f32.mrf.mxu0
        %v449 = vadd.f32 0.0, %v448
        %450 = vdwg.mxu0
        %v451 = vadd.f32 %v421, %v449
        %v452 = vtanh.pop %v451
        %v453 = vmul.f32 %v452, %v425
        %v454 = vadd.f32 %v453, %v426
        %v456 = vperm.slane %v343, 0
        %457 = vrot.lane.b32.xlu0 %v456, 32
        %v458 = vpop.permute.xlu0 %457
        %v460 = vmul.f32 %v454, %v458
        %462 = vrot.lane.b32.xlu0 %v454, 64
        %v463 = vpop.permute.xlu0 %462
        %v465 = vmul.f32 %v454, %v463
        %467 = vrot.lane.b32.xlu0 %v465, 32
        %v468 = vpop.permute.xlu0 %467
        %v470 = vadd.f32 %v460, %v468
        %v471 = vtanh.pop %v470
        %473 = vrot.lane.b32.xlu0 %v471, 64
        %v474 = vpop.permute.xlu0 %473
        %v476 = vmul.f32 %v454, %v474
        %478 = vrot.lane.b32.xlu0 %v476, 32
        %v479 = vpop.permute.xlu0 %478
        %v480 = vsel %vm427, %v479, 0
        %482 = vmatpush.msra.mxu0 0.0
        %483 = vmatpush.msra.mxu0 0.0
        %484 = vmatpush.msra.mxu0 0.0
        %485 = vmatpush.msra.mxu0 0.0
        %486 = vmatpush.msra.mxu0 0.0
        %487 = vmatpush.msra.mxu0 0.0
        %488 = vmatpush.msra.mxu0 0.0
        %489 = vmatpush.msra.mxu0 0.0
        %490 = vmatpush.msra.mxu0 0.0
        %491 = vmatpush.msra.mxu0 0.0
        %492 = vmatpush.msra.mxu0 0.0
        %493 = vmatpush.msra.mxu0 0.0
        %494 = vmatpush.msra.mxu0 %v357
        %495 = vmatpush.msra.mxu0 %v356
        %496 = vmatpush.msra.mxu0 %v355
        %497 = vmatpush.msra.mxu0 %v354
        %498 = vmatmul.f32.gmra.mxu0 %v480
        %v499 = vpop.f32.mrf.mxu0
        %v500 = vadd.f32 0.0, %v499
        %501 = vdwg.mxu0
        %v503 = vrot.slane %v500, 7
        %v505 = vadd.f32 %v421, %v503
        %v506 = vtanh.pop %v505
        %v507 = vmul.f32 %v506, %v425
        %v508 = vadd.f32 %v507, %v426
        %v510 = vrot.slane %v470, 7
        %v512 = vmul.f32 %v508, %v510
        %514 = vrot.lane.b32.xlu0 %v508, 64
        %v515 = vpop.permute.xlu0 %514
        %v517 = vmul.f32 %v508, %v515
        %519 = vrot.lane.b32.xlu0 %v517, 32
        %v520 = vpop.permute.xlu0 %519
        %v522 = vadd.f32 %v512, %v520
        %v523 = vtanh.pop %v522
        %525 = vrot.lane.b32.xlu0 %v523, 64
        %v526 = vpop.permute.xlu0 %525
        %v528 = vmul.f32 %v508, %v526
        %v530 = vrot.slane %v528, 1
        %531 = vrot.lane.b32.xlu0 %v530, 32
        %v532 = vpop.permute.xlu0 %531
        %v533 = vsel %vm427, %v532, 0
        %535 = vmatpush.msra.mxu0 0.0
        %536 = vmatpush.msra.mxu0 0.0
        %537 = vmatpush.msra.mxu0 0.0
        %538 = vmatpush.msra.mxu0 0.0
        %539 = vmatpush.msra.mxu0 0.0
        %540 = vmatpush.msra.mxu0 0.0
        %541 = vmatpush.msra.mxu0 0.0
        %542 = vmatpush.msra.mxu0 0.0
        %543 = vmatpush.msra.mxu0 0.0
        %544 = vmatpush.msra.mxu0 0.0
        %545 = vmatpush.msra.mxu0 0.0
        %546 = vmatpush.msra.mxu0 0.0
        %547 = vmatpush.msra.mxu0 %v357
        %548 = vmatpush.msra.mxu0 %v356
        %549 = vmatpush.msra.mxu0 %v355
        %550 = vmatpush.msra.mxu0 %v354
        %551 = vmatmul.f32.gmra.mxu0 %v533
        %v552 = vpop.f32.mrf.mxu0
        %v553 = vadd.f32 0.0, %v552
        %554 = vdwg.mxu0
        %v556 = vrot.slane %v553, 6
        %v558 = vadd.f32 %v421, %v556
        %v559 = vtanh.pop %v558
        %v560 = vmul.f32 %v559, %v425
        %v561 = vadd.f32 %v560, %v426
        %v563 = vrot.slane %v522, 7
        %v565 = vmul.f32 %v561, %v563
        %567 = vrot.lane.b32.xlu0 %v561, 64
        %v568 = vpop.permute.xlu0 %567
        %v570 = vmul.f32 %v561, %v568
        %572 = vrot.lane.b32.xlu0 %v570, 32
        %v573 = vpop.permute.xlu0 %572
        %v575 = vadd.f32 %v565, %v573
        %v576 = vtanh.pop %v575
        %578 = vrot.lane.b32.xlu0 %v576, 64
        %v579 = vpop.permute.xlu0 %578
        %v581 = vmul.f32 %v561, %v579
        %v583 = vrot.slane %v581, 2
        %584 = vrot.lane.b32.xlu0 %v583, 32
        %v585 = vpop.permute.xlu0 %584
        %v586 = vsel %vm427, %v585, 0
        %588 = vmatpush.msra.mxu0 0.0
        %589 = vmatpush.msra.mxu0 0.0
        %590 = vmatpush.msra.mxu0 0.0
        %591 = vmatpush.msra.mxu0 0.0
        %592 = vmatpush.msra.mxu0 0.0
        %593 = vmatpush.msra.mxu0 0.0
        %594 = vmatpush.msra.mxu0 0.0
        %595 = vmatpush.msra.mxu0 0.0
        %596 = vmatpush.msra.mxu0 0.0
        %597 = vmatpush.msra.mxu0 0.0
        %598 = vmatpush.msra.mxu0 0.0
        %599 = vmatpush.msra.mxu0 0.0
        %600 = vmatpush.msra.mxu0 %v357
        %601 = vmatpush.msra.mxu0 %v356
        %602 = vmatpush.msra.mxu0 %v355
        %603 = vmatpush.msra.mxu0 %v354
        %604 = vmatmul.f32.gmra.mxu0 %v586
        %v605 = vpop.f32.mrf.mxu0
        %v606 = vadd.f32 0.0, %v605
        %607 = vdwg.mxu0
        %v609 = vrot.slane %v606, 5
        %v611 = vadd.f32 %v421, %v609
        %v612 = vtanh.pop %v611
        %v613 = vmul.f32 %v612, %v425
        %v614 = vadd.f32 %v613, %v426
        %v616 = vrot.slane %v575, 7
        %v618 = vmul.f32 %v614, %v616
        %620 = vrot.lane.b32.xlu0 %v614, 64
        %v621 = vpop.permute.xlu0 %620
        %v623 = vmul.f32 %v614, %v621
        %625 = vrot.lane.b32.xlu0 %v623, 32
        %v626 = vpop.permute.xlu0 %625
        %v628 = vadd.f32 %v618, %v626
        %v629 = vtanh.pop %v628
        %631 = vrot.lane.b32.xlu0 %v629, 64
        %v632 = vpop.permute.xlu0 %631
        %v634 = vmul.f32 %v614, %v632
        %v636 = vrot.slane %v634, 3
        %637 = vrot.lane.b32.xlu0 %v636, 32
        %v638 = vpop.permute.xlu0 %637
        %v639 = vsel %vm427, %v638, 0
        %641 = vmatpush.msra.mxu0 0.0
        %642 = vmatpush.msra.mxu0 0.0
        %643 = vmatpush.msra.mxu0 0.0
        %644 = vmatpush.msra.mxu0 0.0
        %645 = vmatpush.msra.mxu0 0.0
        %646 = vmatpush.msra.mxu0 0.0
        %647 = vmatpush.msra.mxu0 0.0
        %648 = vmatpush.msra.mxu0 0.0
        %649 = vmatpush.msra.mxu0 0.0
        %650 = vmatpush.msra.mxu0 0.0
        %651 = vmatpush.msra.mxu0 0.0
        %652 = vmatpush.msra.mxu0 0.0
        %653 = vmatpush.msra.mxu0 %v357
        %654 = vmatpush.msra.mxu0 %v356
        %655 = vmatpush.msra.mxu0 %v355
        %656 = vmatpush.msra.mxu0 %v354
        %657 = vmatmul.f32.gmra.mxu0 %v639
        %v658 = vpop.f32.mrf.mxu0
        %v659 = vadd.f32 0.0, %v658
        %660 = vdwg.mxu0
        %v662 = vrot.slane %v659, 4
        %v664 = vadd.f32 %v421, %v662
        %v665 = vtanh.pop %v664
        %v666 = vmul.f32 %v665, %v425
        %v667 = vadd.f32 %v666, %v426
        %v669 = vrot.slane %v628, 7
        %v671 = vmul.f32 %v667, %v669
        %673 = vrot.lane.b32.xlu0 %v667, 64
        %v674 = vpop.permute.xlu0 %673
        %v676 = vmul.f32 %v667, %v674
        %678 = vrot.lane.b32.xlu0 %v676, 32
        %v679 = vpop.permute.xlu0 %678
        %v681 = vadd.f32 %v671, %v679
        %v682 = vtanh.pop %v681
        %684 = vrot.lane.b32.xlu0 %v682, 64
        %v685 = vpop.permute.xlu0 %684
        %v687 = vmul.f32 %v667, %v685
        %v689 = vrot.slane %v687, 4
        %690 = vrot.lane.b32.xlu0 %v689, 32
        %v691 = vpop.permute.xlu0 %690
        %v692 = vsel %vm427, %v691, 0
        %694 = vmatpush.msra.mxu0 0.0
        %695 = vmatpush.msra.mxu0 0.0
        %696 = vmatpush.msra.mxu0 0.0
        %697 = vmatpush.msra.mxu0 0.0
        %698 = vmatpush.msra.mxu0 0.0
        %699 = vmatpush.msra.mxu0 0.0
        %700 = vmatpush.msra.mxu0 0.0
        %701 = vmatpush.msra.mxu0 0.0
        %702 = vmatpush.msra.mxu0 0.0
        %703 = vmatpush.msra.mxu0 0.0
        %704 = vmatpush.msra.mxu0 0.0
        %705 = vmatpush.msra.mxu0 0.0
        %706 = vmatpush.msra.mxu0 %v357
        %707 = vmatpush.msra.mxu0 %v356
        %708 = vmatpush.msra.mxu0 %v355
        %709 = vmatpush.msra.mxu0 %v354
        %710 = vmatmul.f32.gmra.mxu0 %v692
        %v711 = vpop.f32.mrf.mxu0
        %v712 = vadd.f32 0.0, %v711
        %713 = vdwg.mxu0
        %v715 = vrot.slane %v712, 3
        %v717 = vadd.f32 %v421, %v715
        %v718 = vtanh.pop %v717
        %v719 = vmul.f32 %v718, %v425
        %v720 = vadd.f32 %v719, %v426
        %v722 = vrot.slane %v681, 7
        %v724 = vmul.f32 %v720, %v722
        %726 = vrot.lane.b32.xlu0 %v720, 64
        %v727 = vpop.permute.xlu0 %726
        %v729 = vmul.f32 %v720, %v727
        %731 = vrot.lane.b32.xlu0 %v729, 32
        %v732 = vpop.permute.xlu0 %731
        %v734 = vadd.f32 %v724, %v732
        %v735 = vtanh.pop %v734
        %737 = vrot.lane.b32.xlu0 %v735, 64
        %v738 = vpop.permute.xlu0 %737
        %v740 = vmul.f32 %v720, %v738
        %v742 = vrot.slane %v740, 5
        %743 = vrot.lane.b32.xlu0 %v742, 32
        %v744 = vpop.permute.xlu0 %743
        %v745 = vsel %vm427, %v744, 0
        %747 = vmatpush.msra.mxu0 0.0
        %748 = vmatpush.msra.mxu0 0.0
        %749 = vmatpush.msra.mxu0 0.0
        %750 = vmatpush.msra.mxu0 0.0
        %751 = vmatpush.msra.mxu0 0.0
        %752 = vmatpush.msra.mxu0 0.0
        %753 = vmatpush.msra.mxu0 0.0
        %754 = vmatpush.msra.mxu0 0.0
        %755 = vmatpush.msra.mxu0 0.0
        %756 = vmatpush.msra.mxu0 0.0
        %757 = vmatpush.msra.mxu0 0.0
        %758 = vmatpush.msra.mxu0 0.0
        %759 = vmatpush.msra.mxu0 %v357
        %760 = vmatpush.msra.mxu0 %v356
        %761 = vmatpush.msra.mxu0 %v355
        %762 = vmatpush.msra.mxu0 %v354
        %763 = vmatmul.f32.gmra.mxu0 %v745
        %v764 = vpop.f32.mrf.mxu0
        %v765 = vadd.f32 0.0, %v764
        %766 = vdwg.mxu0
        %v768 = vrot.slane %v765, 2
        %v770 = vadd.f32 %v421, %v768
        %v771 = vtanh.pop %v770
        %v772 = vmul.f32 %v771, %v425
        %v773 = vadd.f32 %v772, %v426
        %v775 = vrot.slane %v734, 7
        %v777 = vmul.f32 %v773, %v775
        %779 = vrot.lane.b32.xlu0 %v773, 64
        %v780 = vpop.permute.xlu0 %779
        %v782 = vmul.f32 %v773, %v780
        %784 = vrot.lane.b32.xlu0 %v782, 32
        %v785 = vpop.permute.xlu0 %784
        %v787 = vadd.f32 %v777, %v785
        %v788 = vtanh.pop %v787
        %790 = vrot.lane.b32.xlu0 %v788, 64
        %v791 = vpop.permute.xlu0 %790
        %v793 = vmul.f32 %v773, %v791
        %v795 = vrot.slane %v793, 6
        %796 = vrot.lane.b32.xlu0 %v795, 32
        %v797 = vpop.permute.xlu0 %796
        %v798 = vsel %vm427, %v797, 0
        %800 = vmatpush.msra.mxu0 0.0
        %801 = vmatpush.msra.mxu0 0.0
        %802 = vmatpush.msra.mxu0 0.0
        %803 = vmatpush.msra.mxu0 0.0
        %804 = vmatpush.msra.mxu0 0.0
        %805 = vmatpush.msra.mxu0 0.0
        %806 = vmatpush.msra.mxu0 0.0
        %807 = vmatpush.msra.mxu0 0.0
        %808 = vmatpush.msra.mxu0 0.0
        %809 = vmatpush.msra.mxu0 0.0
        %810 = vmatpush.msra.mxu0 0.0
        %811 = vmatpush.msra.mxu0 0.0
        %812 = vmatpush.msra.mxu0 %v357
        %813 = vmatpush.msra.mxu0 %v356
        %814 = vmatpush.msra.mxu0 %v355
        %815 = vmatpush.msra.mxu0 %v354
        %816 = vmatmul.f32.gmra.mxu0 %v798
        %v817 = vpop.f32.mrf.mxu0
        %v818 = vadd.f32 0.0, %v817
        %819 = vdwg.mxu0
        %v821 = vrot.slane %v818, 1
        %v823 = vadd.f32 %v421, %v821
        %v824 = vtanh.pop %v823
        %v825 = vmul.f32 %v824, %v425
        %v826 = vadd.f32 %v825, %v426
        %v828 = vrot.slane %v787, 7
        %v830 = vmul.f32 %v826, %v828
        %832 = vrot.lane.b32.xlu0 %v826, 64
        %v833 = vpop.permute.xlu0 %832
        %v835 = vmul.f32 %v826, %v833
        %837 = vrot.lane.b32.xlu0 %v835, 32
        %v838 = vpop.permute.xlu0 %837
        %v840 = vadd.f32 %v830, %v838
        %v841 = vtanh.pop %v840
        %843 = vrot.lane.b32.xlu0 %v841, 64
        %v844 = vpop.permute.xlu0 %843
        %v846 = vmul.f32 %v826, %v844
        %vm847 = vcmask 1040384
        %v848 = vsel %vm847, %v476, %v528
        %vm849 = vcmask 1041408
        %v850 = vsel %vm849, %v848, %v581
        %vm851 = vcmask 1042432
        %v852 = vsel %vm851, %v850, %v634
        %vm853 = vcmask 1043456
        %v854 = vsel %vm853, %v852, %v687
        %vm855 = vcmask 1044480
        %v856 = vsel %vm855, %v854, %v740
        %vm857 = vcmask 1045504
        %v858 = vsel %vm857, %v856, %v793
        %vm859 = vcmask 1046528
        %v860 = vsel %vm859, %v858, %v846
        %v861 = vperm.slane %v363, 0
        %863 = vrot.lane.b32.xlu0 %v860, 32
        %v864 = vpop.permute.xlu0 %863
        %v865 = vsel %vm427, %v864, 0
        %867 = vmatpush.msra.mxu0 0.0
        %868 = vmatpush.msra.mxu0 0.0
        %869 = vmatpush.msra.mxu0 0.0
        %870 = vmatpush.msra.mxu0 0.0
        %871 = vmatpush.msra.mxu0 0.0
        %872 = vmatpush.msra.mxu0 0.0
        %873 = vmatpush.msra.mxu0 0.0
        %874 = vmatpush.msra.mxu0 0.0
        %875 = vmatpush.msra.mxu0 0.0
        %876 = vmatpush.msra.mxu0 0.0
        %877 = vmatpush.msra.mxu0 0.0
        %878 = vmatpush.msra.mxu0 0.0
        %879 = vmatpush.msra.mxu0 %v362
        %880 = vmatpush.msra.mxu0 %v361
        %881 = vmatpush.msra.mxu0 %v360
        %882 = vmatpush.msra.mxu0 %v359
        %883 = vmatmul.f32.gmra.mxu0 %v865
        %v884 = vpop.f32.mrf.mxu0
        %v885 = vadd.f32 %v861, %v884
        %886 = vdwg.mxu0
        %887 = vst [vmem:[%s322] sm:$0xff] %v885
        %889 = vrot.lane.b32.xlu0 %v840, 96
        %v890 = vpop.permute.xlu0 %889
        %vm892 = vcmask 261127
        %893 = vst.msk [vmem:[%s328 - $0x7] sm:$0x80] %vm892, %v890
        %s894 = sand.u32 %s161, 1
        %s895 = scalar_lea.sflag [#allocation4], %s894
        %s896 = sand.u32 %s161, 1
        %s897 = smul.addr %s896, 8
        %s898 = scalar_lea.vmem [#allocation7], %s897
        %s899 = sand.u32 %s187, 1
        %s900 = scalar_lea.sflag [#allocation9], %s899
        %s901 = sand.u32 %s187, 1
        %s902 = scalar_lea.vmem [#allocation8], %s901
        // Predicated region
        $region49: #{decoder_forward.1} parent=39 // pred_check
          %p903 = pneg %p171
        $region50: #{decoder_forward.1} parent=39 // pred_check_branch
          %905 = sbr.rel (%p903) target = $region52
        $region51: #{decoder_forward.1} parent=39 // pred_region
          %907 = vsyncadd %s895, 0
          %s908 = smul.addr %s28, 8
          %s909 = scalar_lea.hbm %s5, %s908
          %s911 = sshll.u32 %s898, 4
          %s912 = int_to_ptr.vmem [resolvable:$true] %s911
          %s913 = sshll.u32 %s909, 4
          %s914 = int_to_ptr.hbm [resolvable:$true] %s913
          %916 = dma.vmem_to_hbm [thread:$0]  %s912, 128, %s914, %s895
        $region52: #{decoder_forward.1} parent=39 // pred_fallthru
          _
        // Predicated region
        $region53: #{decoder_forward.1} parent=39 // pred_check
          %p917 = pneg %p197
        $region54: #{decoder_forward.1} parent=39 // pred_check_branch
          %919 = sbr.rel (%p917) target = $region56
        $region55: #{decoder_forward.1} parent=39 // pred_region
          %921 = vsyncadd %s900, 0
          %s922 = scalar_lea.hbm %s6, %s28
          %s924 = sshll.u32 %s902, 4
          %s925 = int_to_ptr.vmem [resolvable:$true] %s924
          %s926 = sshll.u32 %s922, 4
          %s927 = int_to_ptr.hbm [resolvable:$true] %s926
          %929 = dma.vmem_to_hbm [thread:$0]  %s925, 16, %s927, %s900
        $region56: #{decoder_forward.1} parent=39 // pred_fallthru
          _
      $region40: #{decoder_forward.1} parent=5 // pred_fallthru
        _
      %p930 = scmp.le.s32.totalorder 2, %s23
      // Predicated region
      $region57: #{decoder_forward.1} parent=5 // pred_check
        %p931 = pneg %p930
      $region58: #{decoder_forward.1} parent=5 // pred_check_branch
        %933 = sbr.rel (%p931) target = $region60
      $region59: #{decoder_forward.1} parent=5 // pred_region
        %s934 = ssub.s32 %s23, 2
        // Predicated region
        $region61: #{decoder_forward.1} parent=59 // pred_check
          %p935 = pneg %p177
        $region62: #{decoder_forward.1} parent=59 // pred_check_branch
          %937 = sbr.rel (%p935) target = $region64
        $region63: #{decoder_forward.1} parent=59 // pred_region
          %s938 = sand.u32 %s162, 1
          %s939 = scalar_lea.sflag [#allocation4], %s938
          %s940 = sand.u32 %s162, 1
          %s941 = smul.addr %s940, 8
          %s942 = scalar_lea.vmem [#allocation7], %s941
          %944 = dma.done %s939, 128
        $region64: #{decoder_forward.1} parent=59 // pred_fallthru
          _
        // Predicated region
        $region65: #{decoder_forward.1} parent=59 // pred_check
          %p945 = pneg %p203
        $region66: #{decoder_forward.1} parent=59 // pred_check_branch
          %947 = sbr.rel (%p945) target = $region68
        $region67: #{decoder_forward.1} parent=59 // pred_region
          %s948 = sand.u32 %s188, 1
          %s949 = scalar_lea.sflag [#allocation9], %s948
          %s950 = sand.u32 %s188, 1
          %s951 = scalar_lea.vmem [#allocation8], %s950
          %953 = dma.done %s949, 16
        $region68: #{decoder_forward.1} parent=59 // pred_fallthru
          _
      $region60: #{decoder_forward.1} parent=5 // pred_fallthru
        _
    $region6: #{decoder_forward.1} parent=1 // loop_footer
      %s27 = sadd.s32 1, %s23
    $region7: #{decoder_forward.1} parent=1 // loop_footer_branch
      %22 = sbr.rel target = $region3
    $region8: #{decoder_forward.1} parent=1 // loop_exit
      _
    %954 = vsyncpa [#allocation3], 1
    %s955 = scalar_lea.sflag [#allocation3], 1
    %956 = vsyncpa %s955, 1
    %957 = vsyncpa [#allocation6], 1
    %958 = vsyncpa [#allocation4], 1
    %s959 = scalar_lea.sflag [#allocation4], 1
    %960 = vsyncpa %s959, 1
    %961 = vsyncpa [#allocation9], 1
    %s962 = scalar_lea.sflag [#allocation9], 1
    %963 = vsyncpa %s962, 1

</llo_original>
